<compile_context>
chip_gen: v7x
topology: tpu7x:2x2x1
jax: 0.10.0
libtpu: 0.0.40
codegen_flags: <defaults>
</compile_context>

<pallas_src>
import functools

import jax
import jax.numpy as jnp
from jax.experimental import pallas as pl
from jax.experimental.pallas import tpu as pltpu


# ----------------------------------------------------------------------------
# Elementwise symmetric fake-quantization (quant_type='INT', zero_point = 0)
# ----------------------------------------------------------------------------
_FQ_LANES = 512        # lane-dense slab width (multiple of 128)
_FQ_BLOCK_ROWS = 512   # 512 x 512 f32 = 1 MiB per block


def _fakequant_kernel(scale_ref, x_ref, o_ref, *, qmax):
    scale = scale_ref[0]       # scalar scale from SMEM
    inv_scale = scale_ref[1]   # precomputed 1/scale (0 when scale == 0)
    x = x_ref[...].astype(jnp.float32)
    q = jnp.round(jnp.clip(x * inv_scale, -qmax, qmax))  # round-half-to-even == torch.round
    o_ref[...] = (scale * q).astype(o_ref.dtype)


def fake_quantize(x, qmax):
    """FakeQuantize with INT symmetric scale: scale = max(|x|)/qmax, zero_point = 0."""
    scale = (jnp.max(jnp.abs(x)) / qmax).astype(jnp.float32)
    # Guard the all-zero edge case (PyTorch would produce NaN); output is then all zeros.
    inv_scale = jnp.where(scale > 0.0, 1.0 / scale, 0.0)
    scalars = jnp.stack([scale, inv_scale])          # (2,) f32 -> SMEM

    orig_shape, orig_dtype, n = x.shape, x.dtype, x.size
    flat = x.reshape(-1)
    pad = (-n) % _FQ_LANES
    if pad:                                          # only pad when actually needed
        flat = jnp.pad(flat, (0, pad))
    x2d = flat.reshape(-1, _FQ_LANES)
    rows = x2d.shape[0]
    block_rows = min(_FQ_BLOCK_ROWS, rows)

    out2d = pl.pallas_call(
        functools.partial(_fakequant_kernel, qmax=qmax),
        out_shape=jax.ShapeDtypeStruct((rows, _FQ_LANES), orig_dtype),
        grid=(pl.cdiv(rows, block_rows),),
        in_specs=[
            pl.BlockSpec(memory_space=pltpu.MemorySpace.SMEM),       # (scale, 1/scale)
            pl.BlockSpec((block_rows, _FQ_LANES), lambda i: (i, 0)),
        ],
        out_specs=pl.BlockSpec((block_rows, _FQ_LANES), lambda i: (i, 0)),
        compiler_params=pltpu.CompilerParams(dimension_semantics=("parallel",)),
    )(scalars, x2d)

    out = out2d.reshape(-1)
    if pad:
        out = out[:n]
    return out.reshape(orig_shape)


# ----------------------------------------------------------------------------
# conv2d (+ folded-BN bias + ReLU) as a tiled MXU matmul over im2col patches
# ----------------------------------------------------------------------------
_TM, _TN, _TK = 256, 128, 128


def _conv_bias_relu_kernel(a_ref, b_ref, bias_ref, o_ref, acc_ref):
    @pl.when(pl.program_id(2) == 0)
    def _():
        acc_ref[...] = jnp.zeros_like(acc_ref)

    acc_ref[...] += jnp.dot(a_ref[...], b_ref[...],
                            preferred_element_type=jnp.float32)

    @pl.when(pl.program_id(2) == pl.num_programs(2) - 1)
    def _():
        y = acc_ref[...] + bias_ref[...]                    # bias broadcast over rows
        o_ref[...] = jnp.maximum(y, 0.0).astype(o_ref.dtype)  # fused ReLU


def _round_up(a, b):
    return (a + b - 1) // b * b


def _im2col(x, kh, kw, stride, padding):
    """NCHW -> (N*Ho*Wo, C*kh*kw) patches; feature order (C, kh, kw) matches OIHW weights."""
    N, C, H, W = x.shape
    sh, sw = stride
    ph, pw = padding
    Ho = (H + 2 * ph - kh) // sh + 1
    Wo = (W + 2 * pw - kw) // sw + 1
    xp = jnp.pad(x, ((0, 0), (0, 0), (ph, ph), (pw, pw)))
    cols = []
    for i in range(kh):
        for j in range(kw):
            cols.append(xp[:, :, i:i + sh * Ho:sh, j:j + sw * Wo:sw])  # (N, C, Ho, Wo)
    patches = jnp.stack(cols, axis=2)            # (N, C, kh*kw, Ho, Wo)
    patches = patches.transpose(0, 3, 4, 1, 2)   # (N, Ho, Wo, C, kh*kw)
    return patches.reshape(N * Ho * Wo, C * kh * kw), Ho, Wo


def conv2d_bias_relu(x, w, bias, *, stride=(1, 1), padding=(0, 0)):
    """relu(conv2d(x, w) + bias) for NCHW x, OIHW w (groups=1, dilation=1)."""
    N, C, H, W = x.shape
    C_out, C_in, kh, kw = w.shape
    assert C_in == C, "grouped conv not supported"  # TODO(synk): groups > 1 not implemented

    patches, Ho, Wo = _im2col(x, kh, kw, stride, padding)
    M, K = patches.shape

    K_pad = _round_up(K, _TK)      # zero-pad K so the reduction grid never reads garbage
    N_pad = _round_up(C_out, _TN)  # lane-dense output slab
    M_pad = _round_up(M, 8)
    tm = min(_TM, M_pad)

    a = jnp.pad(patches, ((0, M_pad - M), (0, K_pad - K)))
    b = jnp.pad(w.reshape(C_out, K).T, ((0, K_pad - K), (0, N_pad - C_out)))
    bias2d = jnp.pad(bias.reshape(1, C_out), ((0, 0), (0, N_pad - C_out)))

    out = pl.pallas_call(
        _conv_bias_relu_kernel,
        out_shape=jax.ShapeDtypeStruct((M_pad, N_pad), jnp.float32),
        grid=(pl.cdiv(M_pad, tm), N_pad // _TN, K_pad // _TK),
        in_specs=[
            pl.BlockSpec((tm, _TK), lambda i, j, k: (i, k)),
            pl.BlockSpec((_TK, _TN), lambda i, j, k: (k, j)),
            pl.BlockSpec((1, _TN), lambda i, j, k: (0, j)),
        ],
        out_specs=pl.BlockSpec((tm, _TN), lambda i, j, k: (i, j)),
        scratch_shapes=[pltpu.VMEM((tm, _TN), jnp.float32)],
        compiler_params=pltpu.CompilerParams(
            dimension_semantics=("parallel", "parallel", "arbitrary")),
    )(a, b, bias2d)

    out = out[:M, :C_out].reshape(N, Ho, Wo, C_out).transpose(0, 3, 1, 2)
    return out


# ----------------------------------------------------------------------------
# Full QConvBNReLU forward (eval mode)
# ----------------------------------------------------------------------------
def qconv_bn_relu_forward(x, conv_weight, conv_bias, bn_weight, bn_bias,
                          bn_running_mean, bn_running_var, *,
                          stride=(1, 1), padding=(0, 0), eps=1e-5, num_bits=8):
    qmax = 2.0 ** (num_bits - 1) - 1.0

    # qi.update(x); x = FakeQuantize(x, qi)
    x_fq = fake_quantize(x, qmax)

    # fold BN (affine) into the conv using running statistics (eval mode)
    std = jnp.sqrt(bn_running_var + eps)
    gamma_ = bn_weight / std
    w_fold = conv_weight * gamma_[:, None, None, None]
    if conv_bias is not None:
        b_fold = gamma_ * conv_bias - gamma_ * bn_running_mean + bn_bias
    else:
        b_fold = bn_bias - gamma_ * bn_running_mean

    # qw.update(weight); weight = FakeQuantize(weight, qw)
    w_fq = fake_quantize(w_fold, qmax)

    # conv2d + bias + relu (Pallas MXU matmul with fused epilogue)
    y = conv2d_bias_relu(x_fq, w_fq, b_fold, stride=stride, padding=padding)

    # qo.update(y); y = FakeQuantize(y, qo)
    return fake_quantize(y, qmax)


# ----------------------------------------------------------------------------
# Pure-JAX reference mirroring the PyTorch module (eval mode)
# ----------------------------------------------------------------------------
def _reference(x, conv_weight, conv_bias, bn_weight, bn_bias,
               bn_running_mean, bn_running_var, *,
               stride=(1, 1), padding=(0, 0), eps=1e-5, num_bits=8):
    qmax = 2.0 ** (num_bits - 1) - 1.0

    def fq(t):
        s = jnp.max(jnp.abs(t)) / qmax
        inv = jnp.where(s > 0.0, 1.0 / s, 0.0)
        return s * jnp.round(jnp.clip(t * inv, -qmax, qmax))

    x = fq(x)
    std = jnp.sqrt(bn_running_var + eps)
    g = bn_weight / std
    w = conv_weight * g[:, None, None, None]
    b = (g * conv_bias - g * bn_running_mean + bn_bias) if conv_bias is not None \
        else (bn_bias - g * bn_running_mean)
    w = fq(w)
    y = jax.lax.conv_general_dilated(
        x, w, window_strides=stride,
        padding=[(padding[0], padding[0]), (padding[1], padding[1])],
        dimension_numbers=("NCHW", "OIHW", "NCHW"),
        precision=jax.lax.Precision.HIGHEST)
    y = jnp.maximum(y + b[None, :, None, None], 0.0)
    return fq(y)


if __name__ == "__main__":
    key = jax.random.PRNGKey(0)
    k1, k2, k3, k4, k5, k6 = jax.random.split(key, 6)

    N, C_in, H, W = 2, 4, 16, 16
    C_out, kh, kw = 8, 3, 3
    stride, padding = (1, 1), (1, 1)

    x = jax.random.normal(k1, (N, C_in, H, W), dtype=jnp.float32)
    conv_weight = 0.2 * jax.random.normal(k2, (C_out, C_in, kh, kw), dtype=jnp.float32)
    conv_bias = None  # conv followed by BN typically has no bias
    bn_weight = 1.0 + 0.1 * jax.random.normal(k3, (C_out,), dtype=jnp.float32)
    bn_bias = 0.1 * jax.random.normal(k4, (C_out,), dtype=jnp.float32)
    bn_running_mean = 0.1 * jax.random.normal(k5, (C_out,), dtype=jnp.float32)
    bn_running_var = 0.5 + jnp.abs(jax.random.normal(k6, (C_out,), dtype=jnp.float32))

    y = qconv_bn_relu_forward(x, conv_weight, conv_bias, bn_weight, bn_bias,
                              bn_running_mean, bn_running_var,
                              stride=stride, padding=padding, eps=1e-5, num_bits=8)
    y = jax.block_until_ready(y)

    y_ref = _reference(x, conv_weight, conv_bias, bn_weight, bn_bias,
                       bn_running_mean, bn_running_var,
                       stride=stride, padding=padding, eps=1e-5, num_bits=8)

    assert y.shape == (N, C_out, H, W) and y.dtype == jnp.float32

    # The Pallas conv accumulates in a different order than the XLA reference conv, so
    # a value sitting exactly on a quantization rounding boundary can flip by at most
    # one quantization step. Allow a tiny number of one-step flips, nothing more.
    qstep = float(jnp.max(jnp.abs(y_ref))) / 127.0
    diff = jnp.abs(y - y_ref)
    max_diff = float(jnp.max(diff))
    flip_frac = float(jnp.mean((diff > 1e-4).astype(jnp.float32)))
    assert max_diff <= 1.05 * qstep + 1e-5, f"max diff {max_diff} vs quant step {qstep}"
    assert flip_frac <= 0.02, f"too many mismatched elements: {flip_frac}"

    print("KERNEL_OK")
</pallas_src>

<mosaic_0001>
module attributes {stable_mosaic.version = 11 : i64} {
  func.func @_fakequant_kernel(%arg0: i32, %arg1: memref<2xf32, #tpu.memory_space<smem>>, %arg2: memref<4x512xf32, #tpu.memory_space<vmem>>, %arg3: memref<4x512xf32, #tpu.memory_space<vmem>>) attributes {dimension_semantics = [#tpu.dimension_semantics<parallel>], iteration_bounds = array<i64: 1>, scalar_prefetch = 0 : i64, scratch_operands = 0 : i64, tpu.core_type = #tpu.core_type<tc>, window_params = [{transform_indices = @transform_0, window_bounds = array<i64: 2>}, {transform_indices = @transform_1, window_bounds = array<i64: 4, 512>}, {transform_indices = @transform_2, window_bounds = array<i64: 4, 512>}]} {
    %c0 = arith.constant 0 : index
    %0 = memref.load %arg1[%c0] : memref<2xf32, #tpu.memory_space<smem>>
    %c1 = arith.constant 1 : index
    %1 = memref.load %arg1[%c1] : memref<2xf32, #tpu.memory_space<smem>>
    %c0_0 = arith.constant 0 : index
    %c0_1 = arith.constant 0 : index
    %2 = vector.load %arg2[%c0_0, %c0_1] : memref<4x512xf32, #tpu.memory_space<vmem>>, vector<4x512xf32>
    %3 = vector.broadcast %1 : f32 to vector<4x512xf32>
    %4 = arith.mulf %2, %3 : vector<4x512xf32>
    %cst = arith.constant -1.270000e+02 : f32
    %cst_2 = arith.constant 1.270000e+02 : f32
    %5 = vector.broadcast %cst : f32 to vector<4x512xf32>
    %6 = arith.maximumf %5, %4 : vector<4x512xf32>
    %7 = vector.broadcast %cst_2 : f32 to vector<4x512xf32>
    %8 = arith.minimumf %7, %6 : vector<4x512xf32>
    %9 = math.roundeven %8 : vector<4x512xf32>
    %10 = vector.broadcast %0 : f32 to vector<4x512xf32>
    %11 = arith.mulf %10, %9 : vector<4x512xf32>
    %c0_3 = arith.constant 0 : index
    %c0_4 = arith.constant 0 : index
    %12 = vector.load %arg3[%c0_3, %c0_4] : memref<4x512xf32, #tpu.memory_space<vmem>>, vector<4x512xf32>
    tpu.vector_store %arg3[%c0_3, %c0_4], %11 {strides = array<i32>} : memref<4x512xf32, #tpu.memory_space<vmem>>, vector<4x512xf32>,
    return
  }
  func.func @transform_0(%arg0: i32) -> i32 {
    %c0_i32 = arith.constant 0 : i32
    %c0_i32_0 = arith.constant 0 : i32
    return %c0_i32 : i32
  }
  func.func @transform_1(%arg0: i32) -> (i32, i32) {
    %c0_i32 = arith.constant 0 : i32
    %c0_i32_0 = arith.constant 0 : i32
    return %arg0, %c0_i32 : i32, i32
  }
  func.func @transform_2(%arg0: i32) -> (i32, i32) {
    %c0_i32 = arith.constant 0 : i32
    %c0_i32_0 = arith.constant 0 : i32
    return %arg0, %c0_i32 : i32, i32
  }
}

</mosaic_0001>

<llo_original>
// kernel: tpu_custom_call.1
$region0: #{tpu_custom_call.1}
  #allocation0 [shape = 'u32[]', space=smem, size = 0x4, offset = 0x4, fixed_abs, tag = 'smem constant byte address 0x4 - core index']
  #allocation1 [shape = 'u32[144,128]{1,0:T(1,128)}', space=vmem, size = 0x12000, scoped, tag = 'internal scratch']
  %s0 = inlined_call_operand.hbm [shape: f32[2], index: 0, kind: input, shape index: {}]
  %s1 = inlined_call_operand.hbm [shape: f32[4,512], index: 1, kind: input, shape index: {}]
  %s2 = inlined_call_operand.hbm [shape: f32[4,512], index: 2, kind: output, shape index: {}]
  %s3 = sld [smem:[#allocation0]]
  $region26: #{tpu_custom_call.1} parent=0
    _
  %s5 = ssub.s32 1, %s3
  %s6 = scalar_select 0, %s5, %s3
  $region1: #{tpu_custom_call.1} parent=0
    #allocation2 [shape = 'u8[512]{0}', space=smem, size = 0x200, scoped, tag = 'input window, operand 0, single buffered']
    #allocation3 [shape = 's32[1]{0}', space=sflag, size = 0x4, scoped, tag = 'scoped memory for tpu_custom_call.1']
    #allocation4 [shape = 's32[1]{0}', space=sflag, size = 0x4, scoped, tag = 'scoped memory for tpu_custom_call.1']
    #allocation5 [shape = 's32[1]{0}', space=sflag, size = 0x4, scoped, tag = 'scoped memory for tpu_custom_call.1']
    #allocation6 [shape = 'u8[8192]{0}', space=vmem, size = 0x2000, scoped, tag = 'input window, operand 1, single buffered']
    #allocation7 [shape = 'u8[8192]{0}', space=vmem, size = 0x2000, scoped, tag = 'output window, operand 0, single buffered']
    %7 = vsyncpa [#allocation5], 0
    %8 = vsyncpa [#allocation3], 0
    %9 = vsyncpa [#allocation4], 0
    // Predicated region
    $region2: #{tpu_custom_call.1} parent=1 // pred_check
      _
    $region3: #{tpu_custom_call.1} parent=1 // pred_check_branch
      %11 = sbr.rel (0) target = $region5
    $region4: #{tpu_custom_call.1} parent=1 // pred_region
      %s13 = ssub.s32 16, 16
      %14 = vsyncadd [#allocation5], %s13
      %17 = dma.hbm_to_smem %s0, 16, [#allocation2], [#allocation5]
    $region5: #{tpu_custom_call.1} parent=1 // pred_fallthru
      _
    // Predicated region
    $region6: #{tpu_custom_call.1} parent=1 // pred_check
      _
    $region7: #{tpu_custom_call.1} parent=1 // pred_check_branch
      %19 = sbr.rel (0) target = $region9
    $region8: #{tpu_custom_call.1} parent=1 // pred_region
      %s21 = ssub.s32 256, 256
      %22 = vsyncadd [#allocation3], %s21
      %s24 = sshll.u32 [#allocation6], 4
      %s25 = int_to_ptr.vmem [resolvable:$true] %s24
      %27 = dma.hbm_to_vmem [thread:$0]  %s1, 256, %s25, [#allocation3]
    $region9: #{tpu_custom_call.1} parent=1 // pred_fallthru
      _
    // Predicated region
    $region10: #{tpu_custom_call.1} parent=1 // pred_check
      _
    $region11: #{tpu_custom_call.1} parent=1 // pred_check_branch
      %29 = sbr.rel (0) target = $region13
    $region12: #{tpu_custom_call.1} parent=1 // pred_region
      %30 = dma.done [#allocation5], 16
    $region13: #{tpu_custom_call.1} parent=1 // pred_fallthru
      _
    // Predicated region
    $region14: #{tpu_custom_call.1} parent=1 // pred_check
      _
    $region15: #{tpu_custom_call.1} parent=1 // pred_check_branch
      %32 = sbr.rel (0) target = $region17
    $region16: #{tpu_custom_call.1} parent=1 // pred_region
      %33 = dma.done [#allocation3], 256
    $region17: #{tpu_custom_call.1} parent=1 // pred_fallthru
      _
    %34 = sfence
    %s35 = sld [smem:[#allocation2]]
    %s36 = sld [smem:[#allocation2 + $0x1]]
    %v37 = vld [vmem:[#allocation6] sm:$0xff]
    %v38 = vld [vmem:[#allocation6 + $0x8] sm:$0xff]
    %v39 = vstv %s36
    %v40 = vmul.f32 %v37, %v39
    %v41 = vmul.f32 %v38, %v39
    %v42 = vmax.f32 %v40, -127.0
    %v43 = vmax.f32 %v41, -127.0
    %v44 = vmin.f32 %v42, 127.0
    %v45 = vmin.f32 %v43, 127.0
    %v46 = vround.ne.pseudo %v44
    %v47 = vround.ne.pseudo %v45
    %v48 = vstv %s35
    %v49 = vmul.f32 %v48, %v46
    %v50 = vmul.f32 %v48, %v47
    %51 = vst [vmem:[#allocation7] sm:$0xff] %v49
    %52 = vst [vmem:[#allocation7 + $0x8] sm:$0xff] %v50
    // Predicated region
    $region18: #{tpu_custom_call.1} parent=1 // pred_check
      _
    $region19: #{tpu_custom_call.1} parent=1 // pred_check_branch
      %54 = sbr.rel (0) target = $region21
    $region20: #{tpu_custom_call.1} parent=1 // pred_region
      %s56 = ssub.s32 256, 256
      %57 = vsyncadd [#allocation4], %s56
      %s59 = sshll.u32 [#allocation7], 4
      %s60 = int_to_ptr.vmem [resolvable:$true] %s59
      %62 = dma.vmem_to_hbm [thread:$0]  %s60, 256, %s2, [#allocation4]
    $region21: #{tpu_custom_call.1} parent=1 // pred_fallthru
      _
    // Predicated region
    $region22: #{tpu_custom_call.1} parent=1 // pred_check
      _
    $region23: #{tpu_custom_call.1} parent=1 // pred_check_branch
      %64 = sbr.rel (0) target = $region25
    $region24: #{tpu_custom_call.1} parent=1 // pred_region
      %65 = dma.done [#allocation4], 256
    $region25: #{tpu_custom_call.1} parent=1 // pred_fallthru
      _
    %66 = vsyncpa [#allocation3], 1
    %67 = vsyncpa [#allocation4], 1
    %68 = vsyncpa [#allocation5], 1

</llo_original>
